<compile_context>
chip_gen: v7x
topology: tpu7x:2x2x1
jax: 0.10.0
libtpu: 0.0.40
codegen_flags: <defaults>
</compile_context>

<pallas_src>
import jax
import jax.numpy as jnp
from jax.experimental import pallas as pl
from jax.experimental.pallas import tpu as pltpu

_SUBLANE = 8
_LANE = 128
_TILE_R = 512      # rows per grid step on the large path (2 MiB f32 per input tile)
_TILE_C = 1024     # lane width on the large path


def _plan(n: int):
    """Choose (rows, cols, tile_r, P, K) for n flattened elements."""
    tile_elems = _TILE_R * _TILE_C
    if n <= tile_elems:
        # Single block sized to just cover n (lane width multiple of 128).
        cols = min(_TILE_C, _LANE * pl.cdiv(n, _SUBLANE * _LANE))
        rows = _SUBLANE * pl.cdiv(n, _SUBLANE * cols)
        return rows, cols, rows, 1, 1
    cols = _TILE_C
    num_tiles = pl.cdiv(n, tile_elems)
    p = 2 if num_tiles >= 2 else 1        # 2-way split for megacore (v7x)
    k = pl.cdiv(num_tiles, p)
    rows = p * k * _TILE_R
    return rows, cols, _TILE_R, p, k


def _nse_partial_kernel(yp_ref, yt_ref, out_ref, acc_num, acc_sy, acc_sy2):
    k = pl.program_id(1)

    @pl.when(k == 0)
    def _init():
        acc_num[...] = jnp.zeros_like(acc_num)
        acc_sy[...] = jnp.zeros_like(acc_sy)
        acc_sy2[...] = jnp.zeros_like(acc_sy2)

    tile_r, cols = yp_ref.shape
    g = tile_r // _SUBLANE

    yp = yp_ref[...].astype(jnp.float32)
    yt = yt_ref[...].astype(jnp.float32)
    diff = yp - yt

    def _fold(x):
        # (tile_r, cols) -> (8, cols): adds of aligned sublane groups (pure VPU,
        # no cross-lane reduce per step).
        if g == 1:
            return x
        return jnp.sum(x.reshape(g, _SUBLANE, cols), axis=0)

    acc_num[...] += _fold(diff * diff)
    acc_sy[...] += _fold(yt)
    acc_sy2[...] += _fold(yt * yt)

    @pl.when(k == pl.num_programs(1) - 1)
    def _finalize():
        out_ref[0, 0, :, :] = acc_num[...]
        out_ref[0, 1, :, :] = acc_sy[...]
        out_ref[0, 2, :, :] = acc_sy2[...]


def nse_loss(y_pred: jax.Array, y_true: jax.Array, eps: float = 0.1) -> jax.Array:
    """Pallas-backed NSE loss. `eps` is kept for API parity with the PyTorch
    module but (exactly like the reference forward()) it is unused."""
    del eps
    assert y_pred.shape == y_true.shape
    n = y_pred.size
    rows, cols, tile_r, P, K = _plan(n)

    def _prep(x):
        x = x.reshape(-1)
        pad = rows * cols - n
        if pad:
            x = jnp.pad(x, (0, pad))          # zero padding: exact w.r.t. sums
        return x.reshape(rows, cols)

    partials = pl.pallas_call(
        _nse_partial_kernel,
        out_shape=jax.ShapeDtypeStruct((P, 3, _SUBLANE, cols), jnp.float32),
        grid_spec=pltpu.PrefetchScalarGridSpec(
            num_scalar_prefetch=0,
            grid=(P, K),
            in_specs=[
                pl.BlockSpec((tile_r, cols), lambda p, k: (p * K + k, 0)),
                pl.BlockSpec((tile_r, cols), lambda p, k: (p * K + k, 0)),
            ],
            out_specs=pl.BlockSpec((1, 3, _SUBLANE, cols),
                                   lambda p, k: (p, 0, 0, 0)),
            scratch_shapes=[
                pltpu.VMEM((_SUBLANE, cols), jnp.float32),
                pltpu.VMEM((_SUBLANE, cols), jnp.float32),
                pltpu.VMEM((_SUBLANE, cols), jnp.float32),
            ],
        ),
        compiler_params=pltpu.CompilerParams(
            dimension_semantics=("parallel", "arbitrary"),
            vmem_limit_bytes=32 * 1024 * 1024,
        ),
    )(_prep(y_pred), _prep(y_true))

    # Tiny final cross-lane reduce + closed-form variance (single HBM pass).
    sums = jnp.sum(partials, axis=(0, 2, 3), dtype=jnp.float32)   # (3,)
    numerator, sum_yt, sum_yt2 = sums[0], sums[1], sums[2]
    n_f = jnp.float32(n)
    denominator = sum_yt2 - (sum_yt * sum_yt) / n_f
    # TODO(synk): like the PyTorch forward(), a constant y_true gives denominator==0 -> inf/nan.
    return numerator / denominator - jnp.float32(1.0)


def _nse_loss_ref(y_pred, y_true):
    yp = y_pred.astype(jnp.float32)
    yt = y_true.astype(jnp.float32)
    numerator = jnp.sum((yp - yt) ** 2)
    denominator = jnp.sum((yt - jnp.mean(yt)) ** 2)
    return numerator / denominator - 1.0


if __name__ == "__main__":
    key = jax.random.PRNGKey(0)
    k1, k2, k3, k4 = jax.random.split(key, 4)

    # 1) Small LSTM-style discharge shapes: (batch=2, seq=8, 1) — single-tile path.
    y_true = jax.random.normal(k1, (2, 8, 1), dtype=jnp.float32)
    y_pred = y_true + 0.1 * jax.random.normal(k2, (2, 8, 1), dtype=jnp.float32)
    loss = jax.block_until_ready(nse_loss(y_pred, y_true))
    ref = _nse_loss_ref(y_pred, y_true)
    assert jnp.allclose(loss, ref, rtol=1e-4, atol=1e-5), (loss, ref)

    # 2) Larger input that exercises the tiled (parallel x arbitrary) grid + padding.
    y_true_l = jax.random.normal(k3, (384, 4096, 1), dtype=jnp.float32)
    y_pred_l = y_true_l + 0.1 * jax.random.normal(k4, (384, 4096, 1), dtype=jnp.float32)
    loss_l = jax.block_until_ready(nse_loss(y_pred_l, y_true_l))
    ref_l = _nse_loss_ref(y_pred_l, y_true_l)
    assert jnp.allclose(loss_l, ref_l, rtol=2e-4, atol=1e-5), (loss_l, ref_l)

    # 3) bf16 inputs: HBM traffic halves, accumulation stays f32.
    loss_b = jax.block_until_ready(
        nse_loss(y_pred_l.astype(jnp.bfloat16), y_true_l.astype(jnp.bfloat16)))
    ref_b = _nse_loss_ref(y_pred_l.astype(jnp.bfloat16), y_true_l.astype(jnp.bfloat16))
    assert jnp.allclose(loss_b, ref_b, rtol=1e-2, atol=1e-3), (loss_b, ref_b)

    print("KERNEL_OK")
</pallas_src>

<mosaic_0001>
module attributes {stable_mosaic.version = 11 : i64} {
  func.func @_nse_partial_kernel(%arg0: i32, %arg1: i32, %arg2: memref<8x128xf32, #tpu.memory_space<vmem>>, %arg3: memref<8x128xf32, #tpu.memory_space<vmem>>, %arg4: memref<1x3x8x128xf32, #tpu.memory_space<vmem>>, %arg5: memref<8x128xf32, #tpu.memory_space<vmem>>, %arg6: memref<8x128xf32, #tpu.memory_space<vmem>>, %arg7: memref<8x128xf32, #tpu.memory_space<vmem>>) attributes {dimension_semantics = [#tpu.dimension_semantics<parallel>, #tpu.dimension_semantics<arbitrary>], iteration_bounds = array<i64: 1, 1>, scalar_prefetch = 0 : i64, scratch_operands = 3 : i64, tpu.core_type = #tpu.core_type<tc>, window_params = [{transform_indices = @transform_0, window_bounds = array<i64: 8, 128>}, {transform_indices = @transform_1, window_bounds = array<i64: 8, 128>}, {transform_indices = @transform_2, window_bounds = array<i64: 1, 3, 8, 128>}]} {
    %c0_i32 = arith.constant 0 : i32
    %0 = arith.cmpi eq, %arg1, %c0_i32 : i32
    %1 = arith.extui %0 : i1 to i32
    %c0_i32_0 = arith.constant 0 : i32
    %2 = arith.cmpi ne, %1, %c0_i32_0 : i32
    scf.if %2 {
      %cst = arith.constant 0.000000e+00 : f32
      %20 = vector.broadcast %cst : f32 to vector<8x128xf32>
      %c0_18 = arith.constant 0 : index
      %c0_19 = arith.constant 0 : index
      %21 = vector.load %arg5[%c0_18, %c0_19] : memref<8x128xf32, #tpu.memory_space<vmem>>, vector<8x128xf32>
      tpu.vector_store %arg5[%c0_18, %c0_19], %20 {strides = array<i32>} : memref<8x128xf32, #tpu.memory_space<vmem>>, vector<8x128xf32>,
      %cst_20 = arith.constant 0.000000e+00 : f32
      %22 = vector.broadcast %cst_20 : f32 to vector<8x128xf32>
      %c0_21 = arith.constant 0 : index
      %c0_22 = arith.constant 0 : index
      %23 = vector.load %arg6[%c0_21, %c0_22] : memref<8x128xf32, #tpu.memory_space<vmem>>, vector<8x128xf32>
      tpu.vector_store %arg6[%c0_21, %c0_22], %22 {strides = array<i32>} : memref<8x128xf32, #tpu.memory_space<vmem>>, vector<8x128xf32>,
      %cst_23 = arith.constant 0.000000e+00 : f32
      %24 = vector.broadcast %cst_23 : f32 to vector<8x128xf32>
      %c0_24 = arith.constant 0 : index
      %c0_25 = arith.constant 0 : index
      %25 = vector.load %arg7[%c0_24, %c0_25] : memref<8x128xf32, #tpu.memory_space<vmem>>, vector<8x128xf32>
      tpu.vector_store %arg7[%c0_24, %c0_25], %24 {strides = array<i32>} : memref<8x128xf32, #tpu.memory_space<vmem>>, vector<8x128xf32>,
    } else {
    }
    %c0 = arith.constant 0 : index
    %c0_1 = arith.constant 0 : index
    %3 = vector.load %arg2[%c0, %c0_1] : memref<8x128xf32, #tpu.memory_space<vmem>>, vector<8x128xf32>
    %c0_2 = arith.constant 0 : index
    %c0_3 = arith.constant 0 : index
    %4 = vector.load %arg3[%c0_2, %c0_3] : memref<8x128xf32, #tpu.memory_space<vmem>>, vector<8x128xf32>
    %5 = arith.subf %3, %4 : vector<8x128xf32>
    %c0_4 = arith.constant 0 : index
    %c0_5 = arith.constant 0 : index
    %6 = vector.load %arg5[%c0_4, %c0_5] : memref<8x128xf32, #tpu.memory_space<vmem>>, vector<8x128xf32>
    %7 = arith.mulf %5, %5 : vector<8x128xf32>
    %8 = arith.addf %6, %7 : vector<8x128xf32>
    %c0_6 = arith.constant 0 : index
    %c0_7 = arith.constant 0 : index
    %9 = vector.load %arg5[%c0_6, %c0_7] : memref<8x128xf32, #tpu.memory_space<vmem>>, vector<8x128xf32>
    tpu.vector_store %arg5[%c0_6, %c0_7], %8 {strides = array<i32>} : memref<8x128xf32, #tpu.memory_space<vmem>>, vector<8x128xf32>,
    %c0_8 = arith.constant 0 : index
    %c0_9 = arith.constant 0 : index
    %10 = vector.load %arg6[%c0_8, %c0_9] : memref<8x128xf32, #tpu.memory_space<vmem>>, vector<8x128xf32>
    %11 = arith.addf %10, %4 : vector<8x128xf32>
    %c0_10 = arith.constant 0 : index
    %c0_11 = arith.constant 0 : index
    %12 = vector.load %arg6[%c0_10, %c0_11] : memref<8x128xf32, #tpu.memory_space<vmem>>, vector<8x128xf32>
    tpu.vector_store %arg6[%c0_10, %c0_11], %11 {strides = array<i32>} : memref<8x128xf32, #tpu.memory_space<vmem>>, vector<8x128xf32>,
    %c0_12 = arith.constant 0 : index
    %c0_13 = arith.constant 0 : index
    %13 = vector.load %arg7[%c0_12, %c0_13] : memref<8x128xf32, #tpu.memory_space<vmem>>, vector<8x128xf32>
    %14 = arith.mulf %4, %4 : vector<8x128xf32>
    %15 = arith.addf %13, %14 : vector<8x128xf32>
    %c0_14 = arith.constant 0 : index
    %c0_15 = arith.constant 0 : index
    %16 = vector.load %arg7[%c0_14, %c0_15] : memref<8x128xf32, #tpu.memory_space<vmem>>, vector<8x128xf32>
    tpu.vector_store %arg7[%c0_14, %c0_15], %15 {strides = array<i32>} : memref<8x128xf32, #tpu.memory_space<vmem>>, vector<8x128xf32>,
    %c0_i32_16 = arith.constant 0 : i32
    %17 = arith.cmpi eq, %arg1, %c0_i32_16 : i32
    %18 = arith.extui %17 : i1 to i32
    %c0_i32_17 = arith.constant 0 : i32
    %19 = arith.cmpi ne, %18, %c0_i32_17 : i32
    scf.if %19 {
      %c0_18 = arith.constant 0 : index
      %c0_19 = arith.constant 0 : index
      %20 = vector.load %arg5[%c0_18, %c0_19] : memref<8x128xf32, #tpu.memory_space<vmem>>, vector<8x128xf32>
      %c0_20 = arith.constant 0 : index
      %c0_21 = arith.constant 0 : index
      %c0_22 = arith.constant 0 : index
      %c0_23 = arith.constant 0 : index
      %21 = vector.load %arg4[%c0_20, %c0_21, %c0_22, %c0_23] : memref<1x3x8x128xf32, #tpu.memory_space<vmem>>, vector<1x1x8x128xf32>
      %22 = vector.shape_cast %21 : vector<1x1x8x128xf32> to vector<8x128xf32>
      %23 = vector.shape_cast %20 : vector<8x128xf32> to vector<1x1x8x128xf32>
      tpu.vector_store %arg4[%c0_20, %c0_21, %c0_22, %c0_23], %23 {strides = array<i32>} : memref<1x3x8x128xf32, #tpu.memory_space<vmem>>, vector<1x1x8x128xf32>,
      %c0_24 = arith.constant 0 : index
      %c0_25 = arith.constant 0 : index
      %24 = vector.load %arg6[%c0_24, %c0_25] : memref<8x128xf32, #tpu.memory_space<vmem>>, vector<8x128xf32>
      %c0_26 = arith.constant 0 : index
      %c1 = arith.constant 1 : index
      %c0_27 = arith.constant 0 : index
      %c0_28 = arith.constant 0 : index
      %25 = vector.load %arg4[%c0_26, %c1, %c0_27, %c0_28] : memref<1x3x8x128xf32, #tpu.memory_space<vmem>>, vector<1x1x8x128xf32>
      %26 = vector.shape_cast %25 : vector<1x1x8x128xf32> to vector<8x128xf32>
      %27 = vector.shape_cast %24 : vector<8x128xf32> to vector<1x1x8x128xf32>
      tpu.vector_store %arg4[%c0_26, %c1, %c0_27, %c0_28], %27 {strides = array<i32>} : memref<1x3x8x128xf32, #tpu.memory_space<vmem>>, vector<1x1x8x128xf32>,
      %c0_29 = arith.constant 0 : index
      %c0_30 = arith.constant 0 : index
      %28 = vector.load %arg7[%c0_29, %c0_30] : memref<8x128xf32, #tpu.memory_space<vmem>>, vector<8x128xf32>
      %c0_31 = arith.constant 0 : index
      %c2 = arith.constant 2 : index
      %c0_32 = arith.constant 0 : index
      %c0_33 = arith.constant 0 : index
      %29 = vector.load %arg4[%c0_31, %c2, %c0_32, %c0_33] : memref<1x3x8x128xf32, #tpu.memory_space<vmem>>, vector<1x1x8x128xf32>
      %30 = vector.shape_cast %29 : vector<1x1x8x128xf32> to vector<8x128xf32>
      %31 = vector.shape_cast %28 : vector<8x128xf32> to vector<1x1x8x128xf32>
      tpu.vector_store %arg4[%c0_31, %c2, %c0_32, %c0_33], %31 {strides = array<i32>} : memref<1x3x8x128xf32, #tpu.memory_space<vmem>>, vector<1x1x8x128xf32>,
    } else {
    }
    return
  }
  func.func @transform_0(%arg0: i32, %arg1: i32) -> (i32, i32) {
    %c1_i32 = arith.constant 1 : i32
    %0 = arith.muli %arg0, %c1_i32 : i32
    %1 = arith.addi %0, %arg1 : i32
    %c0_i32 = arith.constant 0 : i32
    %c0_i32_0 = arith.constant 0 : i32
    return %1, %c0_i32 : i32, i32
  }
  func.func @transform_1(%arg0: i32, %arg1: i32) -> (i32, i32) {
    %c1_i32 = arith.constant 1 : i32
    %0 = arith.muli %arg0, %c1_i32 : i32
    %1 = arith.addi %0, %arg1 : i32
    %c0_i32 = arith.constant 0 : i32
    %c0_i32_0 = arith.constant 0 : i32
    return %1, %c0_i32 : i32, i32
  }
  func.func @transform_2(%arg0: i32, %arg1: i32) -> (i32, i32, i32, i32) {
    %c0_i32 = arith.constant 0 : i32
    %c0_i32_0 = arith.constant 0 : i32
    %c0_i32_1 = arith.constant 0 : i32
    %c0_i32_2 = arith.constant 0 : i32
    return %arg0, %c0_i32, %c0_i32_0, %c0_i32_1 : i32, i32, i32, i32
  }
}

</mosaic_0001>

<llo_original>
// kernel: tpu_custom_call.1
$region0: #{tpu_custom_call.1}
  #allocation0 [shape = 'u32[]', space=smem, size = 0x4, offset = 0x4, fixed_abs, tag = 'smem constant byte address 0x4 - core index']
  #allocation1 [shape = 'u32[144,128]{1,0:T(1,128)}', space=vmem, size = 0x12000, scoped, tag = 'internal scratch']
  #allocation2 [shape = 'f32[8,128]{1,0:T(8,128)}', space=vmem, size = 0x1000, scoped, tag = 'scratch operand']
  #allocation3 [shape = 'f32[8,128]{1,0:T(8,128)}', space=vmem, size = 0x1000, scoped, tag = 'scratch operand']
  #allocation4 [shape = 'f32[8,128]{1,0:T(8,128)}', space=vmem, size = 0x1000, scoped, tag = 'scratch operand']
  %s0 = inlined_call_operand.hbm [shape: f32[8,128], index: 0, kind: input, shape index: {}]
  %s1 = inlined_call_operand.hbm [shape: f32[8,128], index: 1, kind: input, shape index: {}]
  %s2 = inlined_call_operand.hbm [shape: f32[1,3,8,128], index: 2, kind: output, shape index: {}]
  %s3 = sld [smem:[#allocation0]]
  $region34: #{tpu_custom_call.1} parent=0
    _
  %s5 = ssub.s32 1, %s3
  %s6 = scalar_select 0, %s5, %s3
  $region1: #{tpu_custom_call.1} parent=0
    #allocation5 [shape = 'u8[4096]{0}', space=vmem, size = 0x1000, scoped, tag = 'input window, operand 0, single buffered']
    #allocation6 [shape = 's32[1]{0}', space=sflag, size = 0x4, scoped, tag = 'scoped memory for tpu_custom_call.1']
    #allocation7 [shape = 's32[1]{0}', space=sflag, size = 0x4, scoped, tag = 'scoped memory for tpu_custom_call.1']
    #allocation8 [shape = 'u8[4096]{0}', space=vmem, size = 0x1000, scoped, tag = 'input window, operand 1, single buffered']
    #allocation9 [shape = 's32[1]{0}', space=sflag, size = 0x4, scoped, tag = 'scoped memory for tpu_custom_call.1']
    #allocation10 [shape = 'u8[12288]{0}', space=vmem, size = 0x3000, scoped, tag = 'output window, operand 0, single buffered']
    %7 = vsyncpa [#allocation6], 0
    %8 = vsyncpa [#allocation9], 0
    %9 = vsyncpa [#allocation7], 0
    // Predicated region
    $region2: #{tpu_custom_call.1} parent=1 // pred_check
      _
    $region3: #{tpu_custom_call.1} parent=1 // pred_check_branch
      %11 = sbr.rel (0) target = $region5
    $region4: #{tpu_custom_call.1} parent=1 // pred_region
      %s12 = sadd.s32 0, 0
      %s14 = ssub.s32 128, 128
      %15 = vsyncadd [#allocation6], %s14
      %s16 = smul.addr %s12, 128
      %s17 = scalar_lea.hbm %s0, %s16
      %s19 = sshll.u32 [#allocation5], 4
      %s20 = int_to_ptr.vmem [resolvable:$true] %s19
      %22 = dma.hbm_to_vmem [thread:$0]  %s17, 128, %s20, [#allocation6]
    $region5: #{tpu_custom_call.1} parent=1 // pred_fallthru
      _
    // Predicated region
    $region6: #{tpu_custom_call.1} parent=1 // pred_check
      _
    $region7: #{tpu_custom_call.1} parent=1 // pred_check_branch
      %24 = sbr.rel (0) target = $region9
    $region8: #{tpu_custom_call.1} parent=1 // pred_region
      %s25 = sadd.s32 0, 0
      %s27 = ssub.s32 128, 128
      %28 = vsyncadd [#allocation9], %s27
      %s29 = smul.addr %s25, 128
      %s30 = scalar_lea.hbm %s1, %s29
      %s32 = sshll.u32 [#allocation8], 4
      %s33 = int_to_ptr.vmem [resolvable:$true] %s32
      %35 = dma.hbm_to_vmem [thread:$0]  %s30, 128, %s33, [#allocation9]
    $region9: #{tpu_custom_call.1} parent=1 // pred_fallthru
      _
    // Predicated region
    $region10: #{tpu_custom_call.1} parent=1 // pred_check
      _
    $region11: #{tpu_custom_call.1} parent=1 // pred_check_branch
      %37 = sbr.rel (0) target = $region13
    $region12: #{tpu_custom_call.1} parent=1 // pred_region
      %38 = dma.done [#allocation6], 128
    $region13: #{tpu_custom_call.1} parent=1 // pred_fallthru
      _
    // Predicated region
    $region14: #{tpu_custom_call.1} parent=1 // pred_check
      _
    $region15: #{tpu_custom_call.1} parent=1 // pred_check_branch
      %40 = sbr.rel (0) target = $region17
    $region16: #{tpu_custom_call.1} parent=1 // pred_region
      %41 = dma.done [#allocation9], 128
    $region17: #{tpu_custom_call.1} parent=1 // pred_fallthru
      _
    %s42 = sadd.s32 0, 0
    %s43 = sadd.s32 0, 0
    %p44 = scmp.eq.s32.totalorder 0, 0
    // Predicated region
    $region18: #{tpu_custom_call.1} parent=1 // pred_check
      %p45 = pneg %p44
    $region19: #{tpu_custom_call.1} parent=1 // pred_check_branch
      %47 = sbr.rel (%p45) target = $region21
    $region20: #{tpu_custom_call.1} parent=1 // pred_region
      %48 = vst [vmem:[#allocation2] sm:$0xff] 0.0
      %49 = vst [vmem:[#allocation3] sm:$0xff] 0.0
      %50 = vst [vmem:[#allocation4] sm:$0xff] 0.0
    $region21: #{tpu_custom_call.1} parent=1 // pred_fallthru
      _
    %v51 = vld [vmem:[#allocation5] sm:$0xff]
    %v52 = vld [vmem:[#allocation8] sm:$0xff]
    %v53 = vsub.f32 %v51, %v52
    %v54 = vld [vmem:[#allocation2] sm:$0xff]
    %v55 = vmul.f32 %v53, %v53
    %v56 = vadd.f32 %v54, %v55
    %57 = vst [vmem:[#allocation2] sm:$0xff] %v56
    %v58 = vld [vmem:[#allocation3] sm:$0xff]
    %v59 = vadd.f32 %v58, %v52
    %60 = vst [vmem:[#allocation3] sm:$0xff] %v59
    %v61 = vld [vmem:[#allocation4] sm:$0xff]
    %v62 = vmul.f32 %v52, %v52
    %v63 = vadd.f32 %v61, %v62
    %64 = vst [vmem:[#allocation4] sm:$0xff] %v63
    // Predicated region
    $region22: #{tpu_custom_call.1} parent=1 // pred_check
      %p65 = pneg %p44
    $region23: #{tpu_custom_call.1} parent=1 // pred_check_branch
      %67 = sbr.rel (%p65) target = $region25
    $region24: #{tpu_custom_call.1} parent=1 // pred_region
      %v68 = vld [vmem:[#allocation2] sm:$0xff]
      %69 = vst [vmem:[#allocation10] sm:$0xff] %v68
      %v70 = vld [vmem:[#allocation3] sm:$0xff]
      %s71 = scalar_lea.vmem [#allocation10], 8
      %72 = vst [vmem:[%s71] sm:$0xff] %v70
      %v73 = vld [vmem:[#allocation4] sm:$0xff]
      %s74 = scalar_lea.vmem [#allocation10], 16
      %75 = vst [vmem:[%s74] sm:$0xff] %v73
    $region25: #{tpu_custom_call.1} parent=1 // pred_fallthru
      _
    // Predicated region
    $region26: #{tpu_custom_call.1} parent=1 // pred_check
      _
    $region27: #{tpu_custom_call.1} parent=1 // pred_check_branch
      %77 = sbr.rel (0) target = $region29
    $region28: #{tpu_custom_call.1} parent=1 // pred_region
      %s79 = ssub.s32 384, 384
      %80 = vsyncadd [#allocation7], %s79
      %s81 = sshll.u32 [#allocation10], 4
      %s82 = int_to_ptr.vmem [resolvable:$true] %s81
      %87 = dma.vmem_to_hbm [thread:$0]  %s82, 384, %s2, [#allocation7], 128, 128, 8
    $region29: #{tpu_custom_call.1} parent=1 // pred_fallthru
      _
    // Predicated region
    $region30: #{tpu_custom_call.1} parent=1 // pred_check
      _
    $region31: #{tpu_custom_call.1} parent=1 // pred_check_branch
      %89 = sbr.rel (0) target = $region33
    $region32: #{tpu_custom_call.1} parent=1 // pred_region
      %90 = dma.done [#allocation7], 384
    $region33: #{tpu_custom_call.1} parent=1 // pred_fallthru
      _
    %91 = vsyncpa [#allocation6], 1
    %92 = vsyncpa [#allocation9], 1
    %93 = vsyncpa [#allocation7], 1

</llo_original>
